<compile_context>
chip_gen: v7x
topology: tpu7x:2x2x1
jax: 0.10.0
libtpu: 0.0.40
codegen_flags: <defaults>
</compile_context>

<pallas_src>
import functools

import jax
import jax.numpy as jnp
from jax.experimental import pallas as pl
from jax.experimental.pallas import tpu as pltpu

_EPS = 1e-5               # nn.LayerNorm default eps
_MAX_FOLDED_LANES = 512   # cap on k*D for the lane-dense fold (proj <= 1 MiB)


def _round_up(x, m):
    return ((x + m - 1) // m) * m


def _vmem_budgets():
    """(tile_budget_bytes, vmem_limit_bytes), gated by TPU generation."""
    try:
        info = pltpu.get_tpu_info()
        vmem_bytes = int(getattr(info, "vmem_capacity_bytes"))
    except Exception:  # unknown / emulated target: assume the small (v7x) VMEM
        vmem_bytes = 64 * 1024 * 1024
    if vmem_bytes >= 100 * 1024 * 1024:        # v5e / v6e: 128 MiB physical
        return 64 * 1024 * 1024, 96 * 1024 * 1024
    return 20 * 1024 * 1024, 48 * 1024 * 1024  # v7x: 64 MiB physical


def _choose_block_rows(n_groups, lane_width, itemsize, tile_budget, proj_lanes=0):
    """Biggest row tile that keeps double-buffered DMA tiles *plus* the
    in-kernel f32 intermediates under the budget, preferring >= 4 (even)
    grid steps for pipelining / megacore balance."""
    row_align = 8 if itemsize >= 4 else (16 if itemsize == 2 else 32)
    if n_groups <= row_align:
        return int(n_groups)  # full-extent first dim, single step
    # 2x double-buffered (in + out) tiles at native dtype + ~4 block-sized
    # f32 intermediates inside the kernel body (x, x*x/centered, mean, y).
    per_row_bytes = 4 * lane_width * itemsize + 4 * lane_width * 4
    budget = tile_budget - 2 * proj_lanes * proj_lanes * 4  # folded projection
    rows = max(row_align, budget // max(per_row_bytes, 1))
    rows = min(rows, 512)  # diminishing returns past ~512 rows (mem-bound)
    # Prefer >= 4 grid steps when there is enough work.
    if n_groups >= 4 * row_align:
        rows = min(rows, _round_up(-(-n_groups // 4), row_align))
    rows = max(row_align, (rows // row_align) * row_align)
    rows = min(rows, _round_up(n_groups, row_align))
    # Nudge to an even number of grid steps (one block per TensorCore pair).
    steps = -(-n_groups // rows)
    if steps > 1 and steps % 2 == 1:
        alt = _round_up(-(-n_groups // (steps + 1)), row_align)
        if alt >= row_align:
            rows = alt
    return int(rows)


def _layernorm_kernel(x_ref, g_ref, b_ref, o_ref, *, eps, act):
    """k == 1 path: plain per-row LayerNorm (two-pass centered variance)."""
    x = x_ref[...].astype(jnp.float32)
    mean = jnp.mean(x, axis=-1, keepdims=True)
    centered = x - mean
    var = jnp.mean(centered * centered, axis=-1, keepdims=True)
    inv = jax.lax.rsqrt(var + eps)
    y = centered * inv * g_ref[...] + b_ref[...]
    if act is not None:
        y = act(y)
    o_ref[...] = y.astype(o_ref.dtype)


def _layernorm_folded_kernel(x_ref, g_ref, b_ref, p_ref, o_ref, *, eps, act):
    """k > 1 path: each row holds k independent length-d segments.  Segment
    statistics come from one MXU matmul each against the block-diagonal
    projection p (1/d inside each segment), fully hidden behind the HBM
    stream.  var = E[x^2] - mean^2 (single pass, f32)."""
    x = x_ref[...].astype(jnp.float32)
    p = p_ref[...]
    mean = jnp.dot(x, p, preferred_element_type=jnp.float32)
    ex2 = jnp.dot(x * x, p, preferred_element_type=jnp.float32)
    var = jnp.maximum(ex2 - mean * mean, 0.0)
    inv = jax.lax.rsqrt(var + eps)
    y = (x - mean) * inv * g_ref[...] + b_ref[...]
    if act is not None:
        y = act(y)
    o_ref[...] = y.astype(o_ref.dtype)


@functools.partial(jax.jit, static_argnames=("act",))
def layernorm_pallas(x2d, gamma, beta, act=None):
    """x2d: (N, D); gamma/beta: (D,).  LayerNorm over D, optional fused
    elementwise `act` applied in the kernel epilogue."""
    n, d = x2d.shape
    dtype = x2d.dtype
    itemsize = jnp.dtype(dtype).itemsize

    # Lane-dense fold: smallest k (<= 16) making k*D a multiple of 128 while
    # keeping the projection matrix small.
    k = 1
    if d % 128 != 0:
        for cand in range(2, 17):
            if (cand * d) % 128 == 0 and cand * d <= _MAX_FOLDED_LANES:
                k = cand
                break
    # TODO(synk): D values with no small 128-friendly fold keep lane-sparse
    # (masked) stores; still correct, just not lane-dense.

    lane_width = k * d
    n_groups = -(-n // k)
    n_pad_rows = n_groups * k - n  # at most k-1 rows (only when folding)
    if n_pad_rows:
        x2d = jnp.pad(x2d, ((0, n_pad_rows), (0, 0)))
    xg = x2d.reshape(n_groups, lane_width)  # free: same row-major bytes

    gamma2 = jnp.tile(gamma.reshape(1, d).astype(jnp.float32), (1, k))
    beta2 = jnp.tile(beta.reshape(1, d).astype(jnp.float32), (1, k))

    tile_budget, vmem_limit = _vmem_budgets()
    block_rows = _choose_block_rows(
        n_groups, lane_width, itemsize, tile_budget,
        proj_lanes=(lane_width if k > 1 else 0))
    grid = (-(-n_groups // block_rows),)  # ragged last block handled by Pallas

    row_spec = pl.BlockSpec((block_rows, lane_width), lambda i: (i, 0))
    vec_spec = pl.BlockSpec((1, lane_width), lambda i: (0, 0))

    if k == 1:
        kernel = functools.partial(_layernorm_kernel, eps=_EPS, act=act)
        in_specs = [row_spec, vec_spec, vec_spec]
        args = (xg, gamma2, beta2)
    else:
        seg = jnp.arange(lane_width, dtype=jnp.int32) // d
        proj = (seg[:, None] == seg[None, :]).astype(jnp.float32) * (1.0 / d)
        kernel = functools.partial(_layernorm_folded_kernel, eps=_EPS, act=act)
        in_specs = [row_spec, vec_spec, vec_spec,
                    pl.BlockSpec((lane_width, lane_width), lambda i: (0, 0))]
        args = (xg, gamma2, beta2, proj)

    out = pl.pallas_call(
        kernel,
        out_shape=jax.ShapeDtypeStruct((n_groups, lane_width), dtype),
        grid_spec=pl.GridSpec(
            grid=grid,
            in_specs=in_specs,
            out_specs=pl.BlockSpec((block_rows, lane_width), lambda i: (i, 0)),
        ),
        compiler_params=pltpu.CompilerParams(
            dimension_semantics=("parallel",),
            vmem_limit_bytes=vmem_limit,
        ),
    )(*args)

    out = out.reshape(n_groups * k, d)
    if n_pad_rows:
        out = out[:n]
    return out


class LayerNormalize:
    """JAX port of the PyTorch LayerNormalize(dim, fn) module."""

    def __init__(self, dim, fn=None, fuse_fn=False, key=None):
        self.dim = dim
        # nn.LayerNorm default init is weight=1, bias=0; a deterministic
        # perturbation is added so the affine path is exercised in the test.
        if key is None:
            key = jax.random.PRNGKey(0)
        kg, kb = jax.random.split(key)
        self.gamma = (jnp.ones((dim,), jnp.float32)
                      + 0.1 * jax.random.normal(kg, (dim,), jnp.float32))
        self.beta = 0.1 * jax.random.normal(kb, (dim,), jnp.float32)
        self.fn = fn
        # Only elementwise fns may be fused into the kernel epilogue; the
        # original module allows arbitrary fn, so fusion is opt-in.
        self.fuse_fn = bool(fuse_fn) and fn is not None

    def __call__(self, x, **kwargs):
        lead = x.shape[:-1]
        d = x.shape[-1]
        x2d = x.reshape((-1, d))
        if self.fuse_fn and not kwargs:
            y = layernorm_pallas(x2d, self.gamma, self.beta, act=self.fn)
            return y.reshape(lead + (d,))
        y = layernorm_pallas(x2d, self.gamma, self.beta).reshape(lead + (d,))
        if self.fn is None:
            return y
        return self.fn(y, **kwargs)


def _reference(x, gamma, beta, fn):
    mean = jnp.mean(x, axis=-1, keepdims=True)
    var = jnp.mean((x - mean) ** 2, axis=-1, keepdims=True)
    y = (x - mean) / jnp.sqrt(var + _EPS) * gamma + beta
    return fn(y)


if __name__ == "__main__":
    key = jax.random.PRNGKey(0)
    kx, kp = jax.random.split(key)

    # Shape implied by the transformer-style module: (batch, seq, hidden).
    batch, seq, hidden = 2, 8, 32
    x = jax.random.normal(kx, (batch, seq, hidden), jnp.float32)

    module = LayerNormalize(hidden, fn=lambda y: y, key=kp)
    out = jax.block_until_ready(module(x))
    ref = _reference(x, module.gamma, module.beta, lambda y: y)
    assert out.shape == (batch, seq, hidden)
    assert jnp.allclose(out, ref, atol=1e-4, rtol=1e-4), "mismatch (folded k>1)"

    # Lane-dense k == 1 path + ragged row count (111 rows -> 4 grid steps,
    # masked last block, no pad/slice copies).
    x_big = jax.random.normal(jax.random.PRNGKey(1), (3, 37, 256), jnp.float32)
    mod_big = LayerNormalize(256, fn=lambda y: y, key=kp)
    out_big = jax.block_until_ready(mod_big(x_big))
    ref_big = _reference(x_big, mod_big.gamma, mod_big.beta, lambda y: y)
    assert jnp.allclose(out_big, ref_big, atol=1e-4, rtol=1e-4), "mismatch (k=1 ragged)"

    # Elementwise fn fused into the kernel epilogue (no extra HBM pass).
    mod_fused = LayerNormalize(256, fn=jax.nn.gelu, fuse_fn=True, key=kp)
    out_fused = jax.block_until_ready(mod_fused(x_big))
    ref_fused = _reference(x_big, mod_fused.gamma, mod_fused.beta, jax.nn.gelu)
    assert jnp.allclose(out_fused, ref_fused, atol=1e-4, rtol=1e-4), "mismatch (fused fn)"

    print("KERNEL_OK")
</pallas_src>

<mosaic_0001>
module attributes {stable_mosaic.version = 11 : i64} {
  func.func @_layernorm_folded_kernel(%arg0: i32, %arg1: memref<4x128xf32, #tpu.memory_space<vmem>>, %arg2: memref<1x128xf32, #tpu.memory_space<vmem>>, %arg3: memref<1x128xf32, #tpu.memory_space<vmem>>, %arg4: memref<128x128xf32, #tpu.memory_space<vmem>>, %arg5: memref<4x128xf32, #tpu.memory_space<vmem>>) attributes {dimension_semantics = [#tpu.dimension_semantics<parallel>], iteration_bounds = array<i64: 1>, scalar_prefetch = 0 : i64, scratch_operands = 0 : i64, tpu.core_type = #tpu.core_type<tc>, window_params = [{transform_indices = @transform_0, window_bounds = array<i64: 4, 128>}, {pipeline_mode = #tpu.pipeline_mode<synchronous>, transform_indices = @transform_1, window_bounds = array<i64: 1, 128>}, {pipeline_mode = #tpu.pipeline_mode<synchronous>, transform_indices = @transform_2, window_bounds = array<i64: 1, 128>}, {pipeline_mode = #tpu.pipeline_mode<synchronous>, transform_indices = @transform_3, window_bounds = array<i64: 128, 128>}, {transform_indices = @transform_4, window_bounds = array<i64: 4, 128>}]} {
    %c0 = arith.constant 0 : index
    %c0_0 = arith.constant 0 : index
    %0 = vector.load %arg1[%c0, %c0_0] : memref<4x128xf32, #tpu.memory_space<vmem>>, vector<4x128xf32>
    %c0_1 = arith.constant 0 : index
    %c0_2 = arith.constant 0 : index
    %1 = vector.load %arg4[%c0_1, %c0_2] : memref<128x128xf32, #tpu.memory_space<vmem>>, vector<128x128xf32>
    %cst = arith.constant dense<0.000000e+00> : vector<4x128xf32>
    %2 = tpu.matmul %0, %1, %cst {dimension_numbers = #tpu.dot_dimension_numbers<[1], [0], [0], [1], [0, 0, 1, 1], [], []>} : vector<4x128xf32>, vector<128x128xf32>, vector<4x128xf32> -> vector<4x128xf32>
    %3 = arith.mulf %0, %0 : vector<4x128xf32>
    %cst_3 = arith.constant dense<0.000000e+00> : vector<4x128xf32>
    %4 = tpu.matmul %3, %1, %cst_3 {dimension_numbers = #tpu.dot_dimension_numbers<[1], [0], [0], [1], [0, 0, 1, 1], [], []>} : vector<4x128xf32>, vector<128x128xf32>, vector<4x128xf32> -> vector<4x128xf32>
    %5 = arith.mulf %2, %2 : vector<4x128xf32>
    %6 = arith.subf %4, %5 : vector<4x128xf32>
    %cst_4 = arith.constant 0.000000e+00 : f32
    %7 = vector.broadcast %cst_4 : f32 to vector<4x128xf32>
    %8 = arith.maximumf %6, %7 : vector<4x128xf32>
    %cst_5 = arith.constant 9.99999974E-6 : f32
    %9 = vector.broadcast %cst_5 : f32 to vector<4x128xf32>
    %10 = arith.addf %8, %9 : vector<4x128xf32>
    %11 = math.rsqrt %10 : vector<4x128xf32>
    %12 = arith.subf %0, %2 : vector<4x128xf32>
    %13 = arith.mulf %12, %11 : vector<4x128xf32>
    %c0_6 = arith.constant 0 : index
    %c0_7 = arith.constant 0 : index
    %14 = vector.load %arg2[%c0_6, %c0_7] : memref<1x128xf32, #tpu.memory_space<vmem>>, vector<1x128xf32>
    %15 = vector.broadcast %14 : vector<1x128xf32> to vector<4x128xf32>
    %16 = arith.mulf %13, %15 : vector<4x128xf32>
    %c0_8 = arith.constant 0 : index
    %c0_9 = arith.constant 0 : index
    %17 = vector.load %arg3[%c0_8, %c0_9] : memref<1x128xf32, #tpu.memory_space<vmem>>, vector<1x128xf32>
    %18 = vector.broadcast %17 : vector<1x128xf32> to vector<4x128xf32>
    %19 = arith.addf %16, %18 : vector<4x128xf32>
    %c0_10 = arith.constant 0 : index
    %c0_11 = arith.constant 0 : index
    %20 = vector.load %arg5[%c0_10, %c0_11] : memref<4x128xf32, #tpu.memory_space<vmem>>, vector<4x128xf32>
    tpu.vector_store %arg5[%c0_10, %c0_11], %19 {strides = array<i32>} : memref<4x128xf32, #tpu.memory_space<vmem>>, vector<4x128xf32>,
    return
  }
  func.func @transform_0(%arg0: i32) -> (i32, i32) {
    %c0_i32 = arith.constant 0 : i32
    %c0_i32_0 = arith.constant 0 : i32
    return %arg0, %c0_i32 : i32, i32
  }
  func.func @transform_1(%arg0: i32) -> (i32, i32) {
    %c0_i32 = arith.constant 0 : i32
    %c0_i32_0 = arith.constant 0 : i32
    %c0_i32_1 = arith.constant 0 : i32
    return %c0_i32, %c0_i32_0 : i32, i32
  }
  func.func @transform_2(%arg0: i32) -> (i32, i32) {
    %c0_i32 = arith.constant 0 : i32
    %c0_i32_0 = arith.constant 0 : i32
    %c0_i32_1 = arith.constant 0 : i32
    return %c0_i32, %c0_i32_0 : i32, i32
  }
  func.func @transform_3(%arg0: i32) -> (i32, i32) {
    %c0_i32 = arith.constant 0 : i32
    %c0_i32_0 = arith.constant 0 : i32
    %c0_i32_1 = arith.constant 0 : i32
    return %c0_i32, %c0_i32_0 : i32, i32
  }
  func.func @transform_4(%arg0: i32) -> (i32, i32) {
    %c0_i32 = arith.constant 0 : i32
    %c0_i32_0 = arith.constant 0 : i32
    return %arg0, %c0_i32 : i32, i32
  }
}

</mosaic_0001>

<llo_original>
// kernel: layernorm_pallas.1
$region0: #{layernorm_pallas.1}
  #allocation0 [shape = 'u32[]', space=smem, size = 0x4, offset = 0x4, fixed_abs, tag = 'smem constant byte address 0x4 - core index']
  #allocation1 [shape = 'u32[144,128]{1,0:T(1,128)}', space=vmem, size = 0x12000, scoped, tag = 'internal scratch']
  %s0 = inlined_call_operand.vmem [shape: f32[4,128], index: 0, kind: input, shape index: {}]
  %s1 = inlined_call_operand.vmem [shape: f32[1,128], index: 1, kind: input, shape index: {}]
  %s2 = inlined_call_operand.vmem [shape: f32[1,128], index: 2, kind: input, shape index: {}]
  %s3 = inlined_call_operand.vmem [shape: f32[128,128], index: 3, kind: input, shape index: {}]
  %s4 = inlined_call_operand.vmem [shape: f32[4,128], index: 4, kind: output, shape index: {}]
  %s5 = sld [smem:[#allocation0]]
  $region26: #{layernorm_pallas.1} parent=0
    _
  %s7 = ssub.s32 1, %s5
  %s8 = scalar_select 0, %s7, %s5
  // Predicated region
  $region2: #{layernorm_pallas.1} parent=0 // pred_check
    _
  $region3: #{layernorm_pallas.1} parent=0 // pred_check_branch
    %10 = sbr.rel (0) target = $region5
  $region4: #{layernorm_pallas.1} parent=0 // pred_region
    _
  $region5: #{layernorm_pallas.1} parent=0 // pred_fallthru
    _
  // Predicated region
  $region6: #{layernorm_pallas.1} parent=0 // pred_check
    _
  $region7: #{layernorm_pallas.1} parent=0 // pred_check_branch
    %12 = sbr.rel (0) target = $region9
  $region8: #{layernorm_pallas.1} parent=0 // pred_region
    _
  $region9: #{layernorm_pallas.1} parent=0 // pred_fallthru
    _
  // Predicated region
  $region10: #{layernorm_pallas.1} parent=0 // pred_check
    _
  $region11: #{layernorm_pallas.1} parent=0 // pred_check_branch
    %14 = sbr.rel (0) target = $region13
  $region12: #{layernorm_pallas.1} parent=0 // pred_region
    _
  $region13: #{layernorm_pallas.1} parent=0 // pred_fallthru
    _
  // Predicated region
  $region14: #{layernorm_pallas.1} parent=0 // pred_check
    _
  $region15: #{layernorm_pallas.1} parent=0 // pred_check_branch
    %16 = sbr.rel (0) target = $region17
  $region16: #{layernorm_pallas.1} parent=0 // pred_region
    _
  $region17: #{layernorm_pallas.1} parent=0 // pred_fallthru
    _
  %v17 = vld [vmem:[%s0] sm:$0xf]
  %v18 = vld [vmem:[%s3] sm:$0xff]
  %v19 = vld [vmem:[%s3 + $0x8] sm:$0xff]
  %v20 = vld [vmem:[%s3 + $0x10] sm:$0xff]
  %v21 = vld [vmem:[%s3 + $0x18] sm:$0xff]
  %v22 = vld [vmem:[%s3 + $0x20] sm:$0xff]
  %v23 = vld [vmem:[%s3 + $0x28] sm:$0xff]
  %v24 = vld [vmem:[%s3 + $0x30] sm:$0xff]
  %v25 = vld [vmem:[%s3 + $0x38] sm:$0xff]
  %v26 = vld [vmem:[%s3 + $0x40] sm:$0xff]
  %v27 = vld [vmem:[%s3 + $0x48] sm:$0xff]
  %v28 = vld [vmem:[%s3 + $0x50] sm:$0xff]
  %v29 = vld [vmem:[%s3 + $0x58] sm:$0xff]
  %v30 = vld [vmem:[%s3 + $0x60] sm:$0xff]
  %v31 = vld [vmem:[%s3 + $0x68] sm:$0xff]
  %v32 = vld [vmem:[%s3 + $0x70] sm:$0xff]
  %v33 = vld [vmem:[%s3 + $0x78] sm:$0xff]
  %34 = vmatprep.subr.mxu0 0.0
  %35 = vmatpush1.msra.mxu0 %v18
  %36 = vmatprep.subr.mxu0 0.0
  %37 = vmatpush1.msra.mxu0 %v19
  %38 = vmatprep.subr.mxu0 0.0
  %39 = vmatpush1.msra.mxu0 %v20
  %40 = vmatprep.subr.mxu0 0.0
  %41 = vmatpush1.msra.mxu0 %v21
  %42 = vmatprep.subr.mxu0 0.0
  %43 = vmatpush1.msra.mxu0 %v22
  %44 = vmatprep.subr.mxu0 0.0
  %45 = vmatpush1.msra.mxu0 %v23
  %46 = vmatprep.subr.mxu0 0.0
  %47 = vmatpush1.msra.mxu0 %v24
  %48 = vmatprep.subr.mxu0 0.0
  %49 = vmatpush1.msra.mxu0 %v25
  %50 = vmatprep.subr.mxu0 0.0
  %51 = vmatpush1.msra.mxu0 %v26
  %52 = vmatprep.subr.mxu0 0.0
  %53 = vmatpush1.msra.mxu0 %v27
  %54 = vmatprep.subr.mxu0 0.0
  %55 = vmatpush1.msra.mxu0 %v28
  %56 = vmatprep.subr.mxu0 0.0
  %57 = vmatpush1.msra.mxu0 %v29
  %58 = vmatprep.subr.mxu0 0.0
  %59 = vmatpush1.msra.mxu0 %v30
  %60 = vmatprep.subr.mxu0 0.0
  %61 = vmatpush1.msra.mxu0 %v31
  %62 = vmatprep.subr.mxu0 0.0
  %63 = vmatpush1.msra.mxu0 %v32
  %64 = vmatprep.subr.mxu0 0.0
  %65 = vmatpush1.msra.mxu0 %v33
  %66 = vmatprep.subr.mxu0 0.0
  %67 = vmatpush1.msra.mxu0 0.0
  %68 = vmatprep.subr.mxu0 0.0
  %69 = vmatpush1.msra.mxu0 0.0
  %70 = vmatprep.subr.mxu0 0.0
  %71 = vmatpush1.msra.mxu0 0.0
  %72 = vmatprep.subr.mxu0 0.0
  %73 = vmatpush1.msra.mxu0 0.0
  %74 = vmatprep.subr.mxu0 0.0
  %75 = vmatpush1.msra.mxu0 0.0
  %76 = vmatprep.subr.mxu0 0.0
  %77 = vmatpush1.msra.mxu0 0.0
  %78 = vmatprep.subr.mxu0 0.0
  %79 = vmatpush1.msra.mxu0 0.0
  %80 = vmatprep.subr.mxu0 0.0
  %81 = vmatpush1.msra.mxu0 0.0
  %82 = vmatprep.subr.mxu0 0.0
  %83 = vmatpush1.msra.mxu0 0.0
  %84 = vmatprep.subr.mxu0 0.0
  %85 = vmatpush1.msra.mxu0 0.0
  %86 = vmatprep.subr.mxu0 0.0
  %87 = vmatpush1.msra.mxu0 0.0
  %88 = vmatprep.subr.mxu0 0.0
  %89 = vmatpush1.msra.mxu0 0.0
  %90 = vmatprep.subr.mxu0 0.0
  %91 = vmatpush1.msra.mxu0 0.0
  %92 = vmatprep.subr.mxu0 0.0
  %93 = vmatpush1.msra.mxu0 0.0
  %94 = vmatprep.subr.mxu0 0.0
  %95 = vmatpush1.msra.mxu0 0.0
  %96 = vmatprep.subr.mxu0 0.0
  %97 = vmatpush1.msra.mxu0 0.0
  %98 = vmatprep.mubr.f32.mxu0 0.0
  %99 = vmatmul.mubr.f32.gmra.mrb[0].mxu0 %v17
  %v100 = vpop.f32.mrb[0].mxu0
  %v101 = vadd.f32 0.0, %v100
  %v102 = vpop.f32.mrb[0].mxu0
  %103 = vdwg.mxu0
  %v104 = vmul.f32 %v17, %v17
  %105 = vmatprep.subr.mxu0 0.0
  %106 = vmatpush1.msra.mxu0 %v18
  %107 = vmatprep.subr.mxu0 0.0
  %108 = vmatpush1.msra.mxu0 %v19
  %109 = vmatprep.subr.mxu0 0.0
  %110 = vmatpush1.msra.mxu0 %v20
  %111 = vmatprep.subr.mxu0 0.0
  %112 = vmatpush1.msra.mxu0 %v21
  %113 = vmatprep.subr.mxu0 0.0
  %114 = vmatpush1.msra.mxu0 %v22
  %115 = vmatprep.subr.mxu0 0.0
  %116 = vmatpush1.msra.mxu0 %v23
  %117 = vmatprep.subr.mxu0 0.0
  %118 = vmatpush1.msra.mxu0 %v24
  %119 = vmatprep.subr.mxu0 0.0
  %120 = vmatpush1.msra.mxu0 %v25
  %121 = vmatprep.subr.mxu0 0.0
  %122 = vmatpush1.msra.mxu0 %v26
  %123 = vmatprep.subr.mxu0 0.0
  %124 = vmatpush1.msra.mxu0 %v27
  %125 = vmatprep.subr.mxu0 0.0
  %126 = vmatpush1.msra.mxu0 %v28
  %127 = vmatprep.subr.mxu0 0.0
  %128 = vmatpush1.msra.mxu0 %v29
  %129 = vmatprep.subr.mxu0 0.0
  %130 = vmatpush1.msra.mxu0 %v30
  %131 = vmatprep.subr.mxu0 0.0
  %132 = vmatpush1.msra.mxu0 %v31
  %133 = vmatprep.subr.mxu0 0.0
  %134 = vmatpush1.msra.mxu0 %v32
  %135 = vmatprep.subr.mxu0 0.0
  %136 = vmatpush1.msra.mxu0 %v33
  %137 = vmatprep.subr.mxu0 0.0
  %138 = vmatpush1.msra.mxu0 0.0
  %139 = vmatprep.subr.mxu0 0.0
  %140 = vmatpush1.msra.mxu0 0.0
  %141 = vmatprep.subr.mxu0 0.0
  %142 = vmatpush1.msra.mxu0 0.0
  %143 = vmatprep.subr.mxu0 0.0
  %144 = vmatpush1.msra.mxu0 0.0
  %145 = vmatprep.subr.mxu0 0.0
  %146 = vmatpush1.msra.mxu0 0.0
  %147 = vmatprep.subr.mxu0 0.0
  %148 = vmatpush1.msra.mxu0 0.0
  %149 = vmatprep.subr.mxu0 0.0
  %150 = vmatpush1.msra.mxu0 0.0
  %151 = vmatprep.subr.mxu0 0.0
  %152 = vmatpush1.msra.mxu0 0.0
  %153 = vmatprep.subr.mxu0 0.0
  %154 = vmatpush1.msra.mxu0 0.0
  %155 = vmatprep.subr.mxu0 0.0
  %156 = vmatpush1.msra.mxu0 0.0
  %157 = vmatprep.subr.mxu0 0.0
  %158 = vmatpush1.msra.mxu0 0.0
  %159 = vmatprep.subr.mxu0 0.0
  %160 = vmatpush1.msra.mxu0 0.0
  %161 = vmatprep.subr.mxu0 0.0
  %162 = vmatpush1.msra.mxu0 0.0
  %163 = vmatprep.subr.mxu0 0.0
  %164 = vmatpush1.msra.mxu0 0.0
  %165 = vmatprep.subr.mxu0 0.0
  %166 = vmatpush1.msra.mxu0 0.0
  %167 = vmatprep.subr.mxu0 0.0
  %168 = vmatpush1.msra.mxu0 0.0
  %169 = vmatprep.mubr.f32.mxu0 0.0
  %170 = vmatmul.mubr.f32.gmra.mrb[0].mxu0 %v104
  %v171 = vpop.f32.mrb[0].mxu0
  %v172 = vadd.f32 0.0, %v171
  %v173 = vpop.f32.mrb[0].mxu0
  %174 = vdwg.mxu0
  %v175 = vmul.f32 %v101, %v101
  %v176 = vsub.f32 %v172, %v175
  %v177 = vmax.f32 %v176, 0.0
  %v178 = vadd.f32 %v177, 1e-05
  %v179 = vrsqrt.pop %v178
  %v180 = vsub.f32 %v17, %v101
  %v181 = vmul.f32 %v180, %v179
  %v182 = vld [vmem:[%s1] sm:$0x1]
  %v184 = vlaneseq
  %v185 = vshrl.u32 %v184, 7
  %v186 = vsub.s32 0, %v185
  %v187 = vrot.slane %v182, %v186
  %v189 = vmul.f32 %v181, %v187
  %v190 = vld [vmem:[%s2] sm:$0x1]
  %v192 = vlaneseq
  %v193 = vshrl.u32 %v192, 7
  %v194 = vsub.s32 0, %v193
  %v195 = vrot.slane %v190, %v194
  %v197 = vadd.f32 %v189, %v195
  %198 = vst [vmem:[%s4] sm:$0xf] %v197
  // Predicated region
  $region18: #{layernorm_pallas.1} parent=0 // pred_check
    _
  $region19: #{layernorm_pallas.1} parent=0 // pred_check_branch
    %200 = sbr.rel (0) target = $region21
  $region20: #{layernorm_pallas.1} parent=0 // pred_region
    _
  $region21: #{layernorm_pallas.1} parent=0 // pred_fallthru
    _
  // Predicated region
  $region22: #{layernorm_pallas.1} parent=0 // pred_check
    _
  $region23: #{layernorm_pallas.1} parent=0 // pred_check_branch
    %202 = sbr.rel (0) target = $region25
  $region24: #{layernorm_pallas.1} parent=0 // pred_region
    _
  $region25: #{layernorm_pallas.1} parent=0 // pred_fallthru
    _

</llo_original>
